<compile_context>
chip_gen: v7x
topology: tpu7x:2x2x1
jax: 0.10.0
libtpu: 0.0.40
codegen_flags: <defaults>
</compile_context>

<pallas_src>
import jax
import jax.numpy as jnp
from jax import lax
from jax.experimental import pallas as pl
from jax.experimental.pallas import tpu as pltpu


def _largest_divisor_leq(n, k):
    k = max(1, min(int(n), int(k)))
    while n % k:
        k -= 1
    return k


def _pick_lane_tile(hw_pad, row_bytes, max_bytes):
    """Largest multiple of 128 dividing hw_pad with tile*row_bytes <= max_bytes."""
    q = hw_pad // 128
    t = max(1, min(q, int(max_bytes // max(row_bytes * 128, 1))))
    while q % t:
        t -= 1
    return t * 128


def _vmem_ceiling():
    # Generation-aware ceiling: ~85% of physical per-core VMEM.
    try:
        cap = int(getattr(pltpu.get_tpu_info(), "vmem_capacity_bytes", 64 << 20))
    except Exception:
        cap = 64 << 20  # conservative (v7x per-TC)
    return int(0.85 * cap)


# ----------------------------------------------------------------------------
# Single-pass path: one grid step per TB batch elements, x read once, written
# once (roofline optimum).  Two chunked passes over the VMEM block bound vreg
# liveness to one chunk at a time.
# ----------------------------------------------------------------------------
def _make_single_pass_kernel(tb, c, hw, hw_pad, pad, chunk):
    n_chunks = hw_pad // chunk
    n_full = n_chunks - 1 if pad > 0 else n_chunks
    inv_hw = 1.0 / float(hw)
    unroll = True if n_chunks <= 8 else 1

    def kernel(x_ref, w1_ref, w2_ref, o_ref):
        # ---- pass 1: pooled statistics (chunked; accumulators are (TB, C, 1)) ----
        def reduce_body(i, carry):
            s, m = carry
            off = pl.multiple_of(i * chunk, chunk)
            xc = x_ref[:, :, pl.ds(off, chunk)].astype(jnp.float32)  # (TB, C, chunk)
            s = s + jnp.sum(xc, axis=-1, keepdims=True)
            m = jnp.maximum(m, jnp.max(xc, axis=-1, keepdims=True))
            return s, m

        s0 = jnp.zeros((tb, c, 1), jnp.float32)
        m0 = jnp.full((tb, c, 1), -jnp.inf, jnp.float32)
        s, m = lax.fori_loop(0, n_full, reduce_body, (s0, m0), unroll=unroll)

        if pad > 0:  # last chunk holds the zero-padded lanes: mask them for the max
            off = (n_chunks - 1) * chunk
            xc = x_ref[:, :, pl.ds(off, chunk)].astype(jnp.float32)
            s = s + jnp.sum(xc, axis=-1, keepdims=True)  # pads are zeros
            lane = lax.broadcasted_iota(jnp.int32, (1, 1, chunk), 2) + off
            xc = jnp.where(lane < hw, xc, -jnp.inf)
            m = jnp.maximum(m, jnp.max(xc, axis=-1, keepdims=True))

        # ---- FC bottleneck: sublane (C-major) layout, both paths of all TB
        #      batches fused into one (hid,C)@(C,2*TB) -> (C,hid)@(hid,2*TB) pair.
        cols = [s[i] * inv_hw for i in range(tb)] + [m[i] for i in range(tb)]
        z = jnp.concatenate(cols, axis=-1)                              # (C, 2*TB)
        h = jnp.maximum(
            jnp.dot(w1_ref[...], z, preferred_element_type=jnp.float32), 0.0)
        y = jnp.dot(w2_ref[...], h, preferred_element_type=jnp.float32)  # (C, 2*TB)
        v = jax.nn.sigmoid(y[:, :tb] + y[:, tb:])                        # (C, TB)

        # ---- pass 2: re-stream x chunk-wise, scale, store (lane-dense stores) ----
        def scale_body(i, carry):
            off = pl.multiple_of(i * chunk, chunk)
            for bi in range(tb):
                xc = x_ref[bi, :, pl.ds(off, chunk)].astype(jnp.float32)  # (C, chunk)
                o_ref[bi, :, pl.ds(off, chunk)] = (
                    xc * v[:, bi:bi + 1]).astype(o_ref.dtype)
            return carry

        lax.fori_loop(0, n_chunks, scale_body, 0, unroll=unroll)

    return kernel


# ----------------------------------------------------------------------------
# Spatial-split fallback (slab too large for single-pass VMEM, e.g. v7x):
# kernel A pools over an HW grid axis with VMEM scratch accumulators and emits
# v on the last tile; kernel B re-streams x and applies the per-channel scale.
# Costs ~1.5x HBM traffic but never blows VMEM.
# ----------------------------------------------------------------------------
def _channel_attention_split(x_flat, w1, w2, hw, hw_pad, pad, ceiling, w_bytes, misc):
    b, c, _ = x_flat.shape
    itemsize = x_flat.dtype.itemsize
    hid = w1.shape[0]
    inv_hw = 1.0 / float(hw)

    block_budget = max((ceiling - misc - 2 * w_bytes) // 4, 128 * c * itemsize)
    hw_tile = _pick_lane_tile(hw_pad, row_bytes=c * itemsize, max_bytes=block_budget)
    n_hw = hw_pad // hw_tile

    def pool_fc_kernel(x_ref, w1_ref, w2_ref, v_ref, s_acc, m_acc):
        j = pl.program_id(1)

        @pl.when(j == 0)
        def _():
            s_acc[...] = jnp.zeros_like(s_acc)
            m_acc[...] = jnp.full_like(m_acc, -jnp.inf)

        xc = x_ref[0].astype(jnp.float32)                     # (C, hw_tile)
        s_acc[...] += jnp.sum(xc, axis=-1, keepdims=True)
        if pad > 0:
            lane = lax.broadcasted_iota(jnp.int32, xc.shape, 1) + j * hw_tile
            xc = jnp.where(lane < hw, xc, -jnp.inf)
        m_acc[...] = jnp.maximum(m_acc[...], jnp.max(xc, axis=-1, keepdims=True))

        @pl.when(j == pl.num_programs(1) - 1)
        def _():
            z = jnp.concatenate([s_acc[...] * inv_hw, m_acc[...]], axis=-1)  # (C, 2)
            h = jnp.maximum(
                jnp.dot(w1_ref[...], z, preferred_element_type=jnp.float32), 0.0)
            y = jnp.dot(w2_ref[...], h, preferred_element_type=jnp.float32)  # (C, 2)
            v_ref[0] = jax.nn.sigmoid(y[:, 0:1] + y[:, 1:2])

    vmem_a = int(min(ceiling, max(32 << 20,
                                  2 * c * hw_tile * itemsize + 2 * w_bytes + misc)))
    v = pl.pallas_call(
        pool_fc_kernel,
        out_shape=jax.ShapeDtypeStruct((b, c, 1), jnp.float32),
        grid=(b, n_hw),
        in_specs=[
            pl.BlockSpec((1, c, hw_tile), lambda i, j: (i, 0, j)),
            pl.BlockSpec((hid, c), lambda i, j: (0, 0)),
            pl.BlockSpec((c, hid), lambda i, j: (0, 0)),
        ],
        out_specs=pl.BlockSpec((1, c, 1), lambda i, j: (i, 0, 0)),
        scratch_shapes=[pltpu.VMEM((c, 1), jnp.float32),
                        pltpu.VMEM((c, 1), jnp.float32)],
        compiler_params=pltpu.CompilerParams(
            dimension_semantics=("parallel", "arbitrary"),
            vmem_limit_bytes=vmem_a),
    )(x_flat, w1, w2)

    def scale_kernel(x_ref, v_ref, o_ref):
        o_ref[...] = (x_ref[...].astype(jnp.float32) * v_ref[...]).astype(o_ref.dtype)

    vmem_b = int(min(ceiling, max(32 << 20, 4 * c * hw_tile * itemsize + misc)))
    out_flat = pl.pallas_call(
        scale_kernel,
        out_shape=jax.ShapeDtypeStruct((b, c, hw_pad), x_flat.dtype),
        grid=(b, n_hw),
        in_specs=[
            pl.BlockSpec((1, c, hw_tile), lambda i, j: (i, 0, j)),
            pl.BlockSpec((1, c, 1), lambda i, j: (i, 0, 0)),
        ],
        out_specs=pl.BlockSpec((1, c, hw_tile), lambda i, j: (i, 0, j)),
        compiler_params=pltpu.CompilerParams(
            dimension_semantics=("parallel", "parallel"),
            vmem_limit_bytes=vmem_b),
    )(x_flat, v)
    return out_flat


def channel_attention_fc(x, w1, w2):
    """x: (B, C, H, W).  w1: (C//ratio, C), w2: (C, C//ratio) — PyTorch nn.Linear
    weight layouts (bias=False); used as-is, no transposes."""
    b, c, h, w = x.shape
    hw = h * w
    hid = w1.shape[0]
    itemsize = x.dtype.itemsize

    # Lane-dense spatial axis: zero-pad HW to a multiple of 128.
    hw_pad = ((hw + 127) // 128) * 128
    pad = hw_pad - hw
    x_flat = x.reshape(b, c, hw)
    if pad > 0:
        x_flat = jnp.pad(x_flat, ((0, 0), (0, 0), (0, pad)))

    ceiling = _vmem_ceiling()
    slab = c * hw_pad * itemsize                          # one batch element
    w_bytes = (w1.size * w1.dtype.itemsize + w2.size * w2.dtype.itemsize)
    misc = 2 << 20                                        # compiler-internal scratch
    # TODO(synk): mark the grid-invariant weight specs pipeline_mode=pl.Buffered(1)
    # once single-buffering is supported on the top-level pallas_call path; until
    # then the budget counts the weights double-buffered.

    single_pass_fits = (4 * slab + 2 * w_bytes + misc) <= ceiling

    if not single_pass_fits:
        out_flat = _channel_attention_split(x_flat, w1, w2, hw, hw_pad, pad,
                                            ceiling, w_bytes, misc)
    else:
        # Batch tiling: biggest TB that fits VMEM / ~4 MiB x-block / divides B,
        # while keeping >= 2 grid steps when B >= 2 (v7x has two TensorCores).
        tb_vmem = (ceiling - 2 * w_bytes - misc) // (4 * slab)
        tb = max(1, min(b, int(tb_vmem), max(1, (4 << 20) // slab)))
        tb = _largest_divisor_leq(b, tb)
        while b >= 2 and b // tb < 2 and tb > 1:
            tb = _largest_divisor_leq(b, tb - 1)

        chunk = _pick_lane_tile(hw_pad, row_bytes=tb * c * itemsize,
                                max_bytes=128 * 1024)
        kernel = _make_single_pass_kernel(tb, c, hw, hw_pad, pad, chunk)
        vmem_limit = int(min(ceiling,
                             max(32 << 20, 4 * tb * slab + 2 * w_bytes + misc)))

        out_flat = pl.pallas_call(
            kernel,
            out_shape=jax.ShapeDtypeStruct((b, c, hw_pad), x.dtype),
            grid=(b // tb,),
            in_specs=[
                pl.BlockSpec((tb, c, hw_pad), lambda i: (i, 0, 0)),
                pl.BlockSpec((hid, c), lambda i: (0, 0)),
                pl.BlockSpec((c, hid), lambda i: (0, 0)),
            ],
            out_specs=pl.BlockSpec((tb, c, hw_pad), lambda i: (i, 0, 0)),
            compiler_params=pltpu.CompilerParams(
                dimension_semantics=("parallel",),
                vmem_limit_bytes=vmem_limit),
        )(x_flat, w1, w2)

    if pad > 0:
        out_flat = out_flat[:, :, :hw]
    return out_flat.reshape(b, c, h, w)


if __name__ == "__main__":
    key = jax.random.PRNGKey(0)
    B, C, H, W = 2, 4, 16, 16
    ratio = 2
    hidden = C // ratio

    kx, k1, k2 = jax.random.split(key, 3)
    x = jax.random.normal(kx, (B, C, H, W), dtype=jnp.float32)
    # Deterministic synthetic Linear weights (PyTorch layout: (out, in)), no bias.
    w1 = jax.random.normal(k1, (hidden, C), dtype=jnp.float32) * (1.0 / float(C) ** 0.5)
    w2 = jax.random.normal(k2, (C, hidden), dtype=jnp.float32) * (1.0 / float(hidden) ** 0.5)

    out = jax.block_until_ready(channel_attention_fc(x, w1, w2))

    # Pure-JAX reference of the PyTorch forward.
    avg = x.mean(axis=(2, 3))
    mx = x.max(axis=(2, 3))

    def fc_ref(z):
        return jnp.maximum(z @ w1.T, 0.0) @ w2.T

    v_ref = jax.nn.sigmoid(fc_ref(avg) + fc_ref(mx))[:, :, None, None]
    ref = x * v_ref
    assert jnp.allclose(out, ref, atol=1e-5, rtol=1e-5), "mismatch vs reference"
    print("KERNEL_OK")
</pallas_src>

<mosaic_0001>
module attributes {stable_mosaic.version = 11 : i64} {
  func.func @kernel(%arg0: i32, %arg1: memref<1x4x256xf32, #tpu.memory_space<vmem>>, %arg2: memref<2x4xf32, #tpu.memory_space<vmem>>, %arg3: memref<4x2xf32, #tpu.memory_space<vmem>>, %arg4: memref<1x4x256xf32, #tpu.memory_space<vmem>>) attributes {dimension_semantics = [#tpu.dimension_semantics<parallel>], iteration_bounds = array<i64: 2>, scalar_prefetch = 0 : i64, scratch_operands = 0 : i64, tpu.core_type = #tpu.core_type<tc>, window_params = [{transform_indices = @transform_0, window_bounds = array<i64: 1, 4, 256>}, {pipeline_mode = #tpu.pipeline_mode<synchronous>, transform_indices = @transform_1, window_bounds = array<i64: 2, 4>}, {pipeline_mode = #tpu.pipeline_mode<synchronous>, transform_indices = @transform_2, window_bounds = array<i64: 4, 2>}, {transform_indices = @transform_3, window_bounds = array<i64: 1, 4, 256>}]} {
    %cst = arith.constant 0.000000e+00 : f32
    %0 = vector.broadcast %cst : f32 to vector<1x4x1xf32>
    %cst_0 = arith.constant 0xFF800000 : f32
    %1 = vector.broadcast %cst_0 : f32 to vector<1x4x1xf32>
    %c0_i32 = arith.constant 0 : i32
    %c256_i32 = arith.constant 256 : i32
    %2 = arith.muli %c0_i32, %c256_i32 : i32
    %3 = tpu.assume_multiple %2, 256 : i32
    %c0 = arith.constant 0 : index
    %c0_1 = arith.constant 0 : index
    %4 = arith.index_cast %3 : i32 to index
    %5 = vector.load %arg1[%c0, %c0_1, %4] : memref<1x4x256xf32, #tpu.memory_space<vmem>>, vector<1x4x256xf32>
    %cst_2 = arith.constant dense<0.000000e+00> : vector<1x4xf32>
    %6 = vector.multi_reduction <add>, %5, %cst_2 [2] : vector<1x4x256xf32> to vector<1x4xf32>
    %7 = vector.shape_cast %6 : vector<1x4xf32> to vector<1x4x1xf32>
    %8 = arith.addf %0, %7 : vector<1x4x1xf32>
    %cst_3 = arith.constant dense<0xFF800000> : vector<1x4xf32>
    %9 = vector.multi_reduction <maximumf>, %5, %cst_3 [2] : vector<1x4x256xf32> to vector<1x4xf32>
    %10 = vector.shape_cast %9 : vector<1x4xf32> to vector<1x4x1xf32>
    %11 = arith.maximumf %1, %10 : vector<1x4x1xf32>
    %c1_i32 = arith.constant 1 : i32
    %12 = vector.shape_cast %8 : vector<1x4x1xf32> to vector<4x1xf32>
    %cst_4 = arith.constant 3.906250e-03 : f32
    %13 = vector.broadcast %cst_4 : f32 to vector<4x1xf32>
    %14 = arith.mulf %12, %13 : vector<4x1xf32>
    %15 = vector.shape_cast %11 : vector<1x4x1xf32> to vector<4x1xf32>
    %16 = tpu.concatenate %14, %15 in 1 : vector<4x1xf32>, vector<4x1xf32> -> vector<4x2xf32>
    %c0_5 = arith.constant 0 : index
    %c0_6 = arith.constant 0 : index
    %17 = vector.load %arg2[%c0_5, %c0_6] : memref<2x4xf32, #tpu.memory_space<vmem>>, vector<2x4xf32>
    %cst_7 = arith.constant dense<0.000000e+00> : vector<2x2xf32>
    %18 = tpu.matmul %17, %16, %cst_7 {dimension_numbers = #tpu.dot_dimension_numbers<[1], [0], [0], [1], [0, 0, 1, 1], [], []>} : vector<2x4xf32>, vector<4x2xf32>, vector<2x2xf32> -> vector<2x2xf32>
    %cst_8 = arith.constant 0.000000e+00 : f32
    %19 = vector.broadcast %cst_8 : f32 to vector<2x2xf32>
    %20 = arith.maximumf %18, %19 : vector<2x2xf32>
    %c0_9 = arith.constant 0 : index
    %c0_10 = arith.constant 0 : index
    %21 = vector.load %arg3[%c0_9, %c0_10] : memref<4x2xf32, #tpu.memory_space<vmem>>, vector<4x2xf32>
    %cst_11 = arith.constant dense<0.000000e+00> : vector<4x2xf32>
    %22 = tpu.matmul %21, %20, %cst_11 {dimension_numbers = #tpu.dot_dimension_numbers<[1], [0], [0], [1], [0, 0, 1, 1], [], []>} : vector<4x2xf32>, vector<2x2xf32>, vector<4x2xf32> -> vector<4x2xf32>
    %23 = vector.extract_strided_slice %22 {offsets = [0, 0], sizes = [4, 1], strides = [1, 1]} : vector<4x2xf32> to vector<4x1xf32>
    %24 = vector.extract_strided_slice %22 {offsets = [0, 1], sizes = [4, 1], strides = [1, 1]} : vector<4x2xf32> to vector<4x1xf32>
    %25 = arith.addf %23, %24 : vector<4x1xf32>
    %26 = arith.negf %25 : vector<4x1xf32>
    %27 = math.exp %26 : vector<4x1xf32>
    %cst_12 = arith.constant 1.000000e+00 : f32
    %28 = vector.broadcast %cst_12 : f32 to vector<4x1xf32>
    %29 = arith.addf %28, %27 : vector<4x1xf32>
    %30 = arith.divf %28, %29 : vector<4x1xf32>
    %c0_i32_13 = arith.constant 0 : i32
    %c256_i32_14 = arith.constant 256 : i32
    %31 = arith.muli %c0_i32_13, %c256_i32_14 : i32
    %32 = tpu.assume_multiple %31, 256 : i32
    %c0_15 = arith.constant 0 : index
    %c0_16 = arith.constant 0 : index
    %33 = arith.index_cast %32 : i32 to index
    %34 = vector.load %arg1[%c0_15, %c0_16, %33] : memref<1x4x256xf32, #tpu.memory_space<vmem>>, vector<1x4x256xf32>
    %35 = vector.shape_cast %34 : vector<1x4x256xf32> to vector<4x256xf32>
    %36 = vector.broadcast %30 : vector<4x1xf32> to vector<4x256xf32>
    %37 = arith.mulf %35, %36 : vector<4x256xf32>
    %c0_17 = arith.constant 0 : index
    %c0_18 = arith.constant 0 : index
    %38 = arith.index_cast %32 : i32 to index
    %39 = vector.load %arg4[%c0_17, %c0_18, %38] : memref<1x4x256xf32, #tpu.memory_space<vmem>>, vector<1x4x256xf32>
    %40 = vector.shape_cast %39 : vector<1x4x256xf32> to vector<4x256xf32>
    %41 = vector.shape_cast %37 : vector<4x256xf32> to vector<1x4x256xf32>
    tpu.vector_store %arg4[%c0_17, %c0_18, %38], %41 {strides = array<i32>} : memref<1x4x256xf32, #tpu.memory_space<vmem>>, vector<1x4x256xf32>,
    %c1_i32_19 = arith.constant 1 : i32
    return
  }
  func.func @transform_0(%arg0: i32) -> (i32, i32, i32) {
    %c0_i32 = arith.constant 0 : i32
    %c0_i32_0 = arith.constant 0 : i32
    %c0_i32_1 = arith.constant 0 : i32
    return %arg0, %c0_i32, %c0_i32_0 : i32, i32, i32
  }
  func.func @transform_1(%arg0: i32) -> (i32, i32) {
    %c0_i32 = arith.constant 0 : i32
    %c0_i32_0 = arith.constant 0 : i32
    %c0_i32_1 = arith.constant 0 : i32
    return %c0_i32, %c0_i32_0 : i32, i32
  }
  func.func @transform_2(%arg0: i32) -> (i32, i32) {
    %c0_i32 = arith.constant 0 : i32
    %c0_i32_0 = arith.constant 0 : i32
    %c0_i32_1 = arith.constant 0 : i32
    return %c0_i32, %c0_i32_0 : i32, i32
  }
  func.func @transform_3(%arg0: i32) -> (i32, i32, i32) {
    %c0_i32 = arith.constant 0 : i32
    %c0_i32_0 = arith.constant 0 : i32
    %c0_i32_1 = arith.constant 0 : i32
    return %arg0, %c0_i32, %c0_i32_0 : i32, i32, i32
  }
}

</mosaic_0001>

<llo_original>
// kernel: tpu_custom_call.1
$region0: #{tpu_custom_call.1}
  #allocation0 [shape = 'u32[]', space=smem, size = 0x4, offset = 0x4, fixed_abs, tag = 'smem constant byte address 0x4 - core index']
  #allocation1 [shape = 'u32[144,128]{1,0:T(1,128)}', space=vmem, size = 0x12000, scoped, tag = 'internal scratch']
  %s0 = inlined_call_operand.hbm [shape: f32[2,4,256], index: 0, kind: input, shape index: {}]
  %s1 = inlined_call_operand.vmem [shape: f32[2,4], index: 1, kind: input, shape index: {}]
  %s2 = inlined_call_operand.vmem [shape: f32[4,2], index: 2, kind: input, shape index: {}]
  %s3 = inlined_call_operand.hbm [shape: f32[2,4,256], index: 3, kind: output, shape index: {}]
  %s4 = sld [smem:[#allocation0]]
  $region49: #{tpu_custom_call.1} parent=0
    _
  %s6 = ssub.s32 1, %s4
  %s7 = scalar_select 0, %s6, %s4
  $region1: #{tpu_custom_call.1} parent=0
    #allocation2 [shape = 'u8[8192]{0}', space=vmem, size = 0x2000, scoped, tag = 'input window, operand 0']
    #allocation3 [shape = 's32[2]{0}', space=sflag, size = 0x8, scoped, tag = 'scoped memory for tpu_custom_call.1']
    #allocation4 [shape = 's32[2]{0}', space=sflag, size = 0x8, scoped, tag = 'scoped memory for tpu_custom_call.1']
    #allocation5 [shape = 'u8[8192]{0}', space=vmem, size = 0x2000, scoped, tag = 'output window, operand 0']
    %8 = vsyncpa [#allocation3], 0
    %s9 = scalar_lea.sflag [#allocation3], 1
    %10 = vsyncpa %s9, 0
    %11 = vsyncpa [#allocation4], 0
    %s12 = scalar_lea.sflag [#allocation4], 1
    %13 = vsyncpa %s12, 0
    loop: start=0, step=1, limit=4
    $region2: #{tpu_custom_call.1} parent=1 // loop_pre_header
      _
    $region3: #{tpu_custom_call.1} parent=1 // loop_header
      %s15 = sphi 0, %s19
      %p16 = scmp.ge.s32.totalorder %s15, 4
      %s25 = sphi 0, %s27
      %s28 = sphi 0, %s25
      %s29 = sphi 0, %s28
      %s45 = sphi 0, %s29
      %s49 = sphi 0, %s49
      %s51 = sphi 0, %s49
      %s52 = sphi 0, %s51
      %s66 = sphi 0, %s52
      %s70 = sphi 0, %s70
      %s72 = sphi 0, %s70
      %s73 = sphi 0, %s72
      %s87 = sphi 0, %s73
      %s93 = sphi 0, %s95
      %s96 = sphi 0, %s93
      %s97 = sphi 0, %s96
      %s113 = sphi 0, %s97
    $region4: #{tpu_custom_call.1} parent=1 // loop_header_branch
      %18 = sbr.rel (%p16) target = $region8
    $region5: #{tpu_custom_call.1} parent=1 // loop_body
      %s20 = ssub.s32 %s15, 1
      %s21 = ssub.s32 %s15, 2
      %s22 = sadd.s32 %s15, 1
      %s23 = ssub.s32 %s15, %s22
      %p24 = scmp.eq.s32.totalorder %s23, 0
      %s26 = sadd.s32 %s25, 1
      %s27 = scalar_select %p24, %s25, %s26
      %p30 = pneg %p24
      %p31 = scmp.eq.s32.totalorder %s15, 1
      %p32 = por %p30, %p31
      %p33 = scmp.ne.s32.totalorder %s25, %s28
      %p34 = scmp.eq.s32.totalorder %s15, 0
      %p35 = por %p33, %p34
      %p36 = scmp.ne.s32.totalorder %s25, %s28
      %p37 = scmp.eq.s32.totalorder %s20, 1
      %p38 = por %p36, %p37
      %p39 = scmp.ne.s32.totalorder %s28, %s29
      %p40 = scmp.eq.s32.totalorder %s20, 0
      %p41 = por %p39, %p40
      %p42 = scmp.ne.s32.totalorder %s28, %s29
      %p43 = scmp.eq.s32.totalorder %s21, 1
      %p44 = por %p42, %p43
      %p46 = scmp.ne.s32.totalorder %s29, %s45
      %p47 = scmp.eq.s32.totalorder %s21, 0
      %p48 = por %p46, %p47
      %s50 = sadd.s32 %s49, 1
      %p53 = scmp.eq.s32.totalorder %s15, 1
      %p54 = scmp.ne.s32.totalorder %s49, %s51
      %p55 = scmp.eq.s32.totalorder %s15, 0
      %p56 = por %p54, %p55
      %p57 = scmp.ne.s32.totalorder %s49, %s51
      %p58 = scmp.eq.s32.totalorder %s20, 1
      %p59 = por %p57, %p58
      %p60 = scmp.ne.s32.totalorder %s51, %s52
      %p61 = scmp.eq.s32.totalorder %s20, 0
      %p62 = por %p60, %p61
      %p63 = scmp.ne.s32.totalorder %s51, %s52
      %p64 = scmp.eq.s32.totalorder %s21, 1
      %p65 = por %p63, %p64
      %p67 = scmp.ne.s32.totalorder %s52, %s66
      %p68 = scmp.eq.s32.totalorder %s21, 0
      %p69 = por %p67, %p68
      %s71 = sadd.s32 %s70, 1
      %p74 = scmp.eq.s32.totalorder %s15, 1
      %p75 = scmp.ne.s32.totalorder %s70, %s72
      %p76 = scmp.eq.s32.totalorder %s15, 0
      %p77 = por %p75, %p76
      %p78 = scmp.ne.s32.totalorder %s70, %s72
      %p79 = scmp.eq.s32.totalorder %s20, 1
      %p80 = por %p78, %p79
      %p81 = scmp.ne.s32.totalorder %s72, %s73
      %p82 = scmp.eq.s32.totalorder %s20, 0
      %p83 = por %p81, %p82
      %p84 = scmp.ne.s32.totalorder %s72, %s73
      %p85 = scmp.eq.s32.totalorder %s21, 1
      %p86 = por %p84, %p85
      %p88 = scmp.ne.s32.totalorder %s73, %s87
      %p89 = scmp.eq.s32.totalorder %s21, 0
      %p90 = por %p88, %p89
      %s91 = ssub.s32 %s15, %s22
      %p92 = scmp.eq.s32.totalorder %s91, 0
      %s94 = sadd.s32 %s93, 1
      %s95 = scalar_select %p92, %s93, %s94
      %p98 = pneg %p92
      %p99 = scmp.eq.s32.totalorder %s15, 1
      %p100 = por %p98, %p99
      %p101 = scmp.ne.s32.totalorder %s93, %s96
      %p102 = scmp.eq.s32.totalorder %s15, 0
      %p103 = por %p101, %p102
      %p104 = scmp.ne.s32.totalorder %s93, %s96
      %p105 = scmp.eq.s32.totalorder %s20, 1
      %p106 = por %p104, %p105
      %p107 = scmp.ne.s32.totalorder %s96, %s97
      %p108 = scmp.eq.s32.totalorder %s20, 0
      %p109 = por %p107, %p108
      %p110 = scmp.ne.s32.totalorder %s96, %s97
      %p111 = scmp.eq.s32.totalorder %s21, 1
      %p112 = por %p110, %p111
      %p114 = scmp.ne.s32.totalorder %s97, %s113
      %p115 = scmp.eq.s32.totalorder %s21, 0
      %p116 = por %p114, %p115
      %p117 = scmp.le.s32.totalorder 1, %s15
      %p118 = scmp.lt.s32.totalorder %s15, 3
      %p119 = pnand %p117, %p118
      %p120 = pneg %p119
      // Predicated region
      $region9: #{tpu_custom_call.1} parent=5 // pred_check
        _
      $region10: #{tpu_custom_call.1} parent=5 // pred_check_branch
        %122 = sbr.rel (%p119) target = $region12
      $region11: #{tpu_custom_call.1} parent=5 // pred_region
        %s123 = ssub.s32 %s15, 1
        // Predicated region
        $region13: #{tpu_custom_call.1} parent=11 // pred_check
          %p124 = pneg %p62
        $region14: #{tpu_custom_call.1} parent=11 // pred_check_branch
          %126 = sbr.rel (%p124) target = $region16
        $region15: #{tpu_custom_call.1} parent=11 // pred_region
          _
        $region16: #{tpu_custom_call.1} parent=11 // pred_fallthru
          _
        // Predicated region
        $region17: #{tpu_custom_call.1} parent=11 // pred_check
          %p127 = pneg %p83
        $region18: #{tpu_custom_call.1} parent=11 // pred_check_branch
          %129 = sbr.rel (%p127) target = $region20
        $region19: #{tpu_custom_call.1} parent=11 // pred_region
          _
        $region20: #{tpu_custom_call.1} parent=11 // pred_fallthru
          _
      $region12: #{tpu_custom_call.1} parent=5 // pred_fallthru
        _
      %p130 = scmp.lt.s32.totalorder %s15, 2
      // Predicated region
      $region21: #{tpu_custom_call.1} parent=5 // pred_check
        %p131 = pneg %p130
      $region22: #{tpu_custom_call.1} parent=5 // pred_check_branch
        %133 = sbr.rel (%p131) target = $region24
      $region23: #{tpu_custom_call.1} parent=5 // pred_region
        // Predicated region
        $region25: #{tpu_custom_call.1} parent=23 // pred_check
          %p134 = pneg %p35
        $region26: #{tpu_custom_call.1} parent=23 // pred_check_branch
          %136 = sbr.rel (%p134) target = $region28
        $region27: #{tpu_custom_call.1} parent=23 // pred_region
          %s137 = sand.u32 %s25, 1
          %s138 = scalar_lea.sflag [#allocation3], %s137
          %s139 = sand.u32 %s25, 1
          %s140 = smul.addr %s139, 8
          %s141 = scalar_lea.vmem [#allocation2], %s140
          %s143 = ssub.s32 128, 128
          %144 = vsyncadd %s138, %s143
          %s145 = smul.addr %s15, 2
          %s146 = smul.addr %s145, 64
          %s147 = scalar_lea.hbm %s0, %s146
          %s149 = sshll.u32 %s141, 4
          %s150 = int_to_ptr.vmem [resolvable:$true] %s149
          %152 = dma.hbm_to_vmem [thread:$0]  %s147, 128, %s150, %s138
        $region28: #{tpu_custom_call.1} parent=23 // pred_fallthru
          _
      $region24: #{tpu_custom_call.1} parent=5 // pred_fallthru
        _
      %p153 = scmp.le.s32.totalorder 1, %s15
      %p154 = scmp.lt.s32.totalorder %s15, 3
      %p155 = pnand %p153, %p154
      %p156 = pneg %p155
      // Predicated region
      $region29: #{tpu_custom_call.1} parent=5 // pred_check
        _
      $region30: #{tpu_custom_call.1} parent=5 // pred_check_branch
        %158 = sbr.rel (%p155) target = $region32
      $region31: #{tpu_custom_call.1} parent=5 // pred_region
        %s159 = ssub.s32 %s15, 1
        %s160 = sand.u32 %s28, 1
        %s161 = scalar_lea.sflag [#allocation3], %s160
        %s162 = sand.u32 %s28, 1
        %s163 = smul.addr %s162, 8
        %s164 = scalar_lea.vmem [#allocation2], %s163
        // Predicated region
        $region33: #{tpu_custom_call.1} parent=31 // pred_check
          %p165 = pneg %p41
        $region34: #{tpu_custom_call.1} parent=31 // pred_check_branch
          %167 = sbr.rel (%p165) target = $region36
        $region35: #{tpu_custom_call.1} parent=31 // pred_region
          %168 = dma.done %s161, 128
        $region36: #{tpu_custom_call.1} parent=31 // pred_fallthru
          _
        %s169 = sand.u32 %s28, 1
        %s170 = scalar_lea.sflag [#allocation3], %s169
        %s171 = sand.u32 %s28, 1
        %s172 = smul.addr %s171, 8
        %s173 = scalar_lea.vmem [#allocation2], %s172
        %p174 = pneg %p41
        %p175 = pneg %p38
        %p176 = pneg %p62
        %p177 = pneg %p59
        %p178 = pneg %p83
        %p179 = pneg %p80
        %p180 = pneg %p109
        %p181 = pneg %p106
        %s182 = sand.u32 %s96, 1
        %s183 = scalar_lea.sflag [#allocation4], %s182
        %s184 = sand.u32 %s96, 1
        %s185 = smul.addr %s184, 8
        %s186 = scalar_lea.vmem [#allocation5], %s185
        %v187 = vld [vmem:[%s164] sm:$0xff]
        %v189 = vcombine.high %v187, %v187
        %vm191 = vcmask 1043456
        %v192 = vsel %vm191, %v187, 0.0
        %v193 = vsel %vm191, %v189, 0.0
        %v194 = vadd.f32 %v192, %v193
        %195 = vadd.xlane.f32.xlu0 %v194
        %v196 = vpop.xlane.xlu0 %195
        %v197 = vadd.f32 %v196, 0.0
        %v198 = vsel %vm191, %v187, -inf
        %v199 = vsel %vm191, %v189, -inf
        %v200 = vmax.f32 %v198, %v199
        %201 = vmax.xlane.f32.xlu0 %v200
        %v202 = vpop.xlane.xlu0 %201
        %v203 = vmul.f32 %v197, 0.00390625
        %vm204 = vcmask 7168
        %v205 = vsel %vm204, %v203, %v202
        %v206 = vld [vmem:[%s1] sm:$0x3]
        %vm207 = vcmask 31744
        %v209 = vsel %vm207, %v206, 0
        %v212 = vsel %vm191, %v205, 0
        %214 = vmatprep.subr.mxu0 0.0
        %215 = vmatpush1.msra.mxu0 %v212
        %216 = vmatprep.subr.mxu0 0.0
        %217 = vmatpush1.msra.mxu0 0.0
        %218 = vmatprep.subr.mxu0 0.0
        %219 = vmatpush1.msra.mxu0 0.0
        %220 = vmatprep.subr.mxu0 0.0
        %221 = vmatpush1.msra.mxu0 0.0
        %222 = vmatprep.subr.mxu0 0.0
        %223 = vmatpush1.msra.mxu0 0.0
        %224 = vmatprep.subr.mxu0 0.0
        %225 = vmatpush1.msra.mxu0 0.0
        %226 = vmatprep.subr.mxu0 0.0
        %227 = vmatpush1.msra.mxu0 0.0
        %228 = vmatprep.subr.mxu0 0.0
        %229 = vmatpush1.msra.mxu0 0.0
        %230 = vmatprep.subr.mxu0 0.0
        %231 = vmatpush1.msra.mxu0 0.0
        %232 = vmatprep.subr.mxu0 0.0
        %233 = vmatpush1.msra.mxu0 0.0
        %234 = vmatprep.subr.mxu0 0.0
        %235 = vmatpush1.msra.mxu0 0.0
        %236 = vmatprep.subr.mxu0 0.0
        %237 = vmatpush1.msra.mxu0 0.0
        %238 = vmatprep.subr.mxu0 0.0
        %239 = vmatpush1.msra.mxu0 0.0
        %240 = vmatprep.subr.mxu0 0.0
        %241 = vmatpush1.msra.mxu0 0.0
        %242 = vmatprep.subr.mxu0 0.0
        %243 = vmatpush1.msra.mxu0 0.0
        %244 = vmatprep.subr.mxu0 0.0
        %245 = vmatpush1.msra.mxu0 0.0
        %246 = vmatprep.subr.mxu0 0.0
        %247 = vmatpush1.msra.mxu0 0.0
        %248 = vmatprep.subr.mxu0 0.0
        %249 = vmatpush1.msra.mxu0 0.0
        %250 = vmatprep.subr.mxu0 0.0
        %251 = vmatpush1.msra.mxu0 0.0
        %252 = vmatprep.subr.mxu0 0.0
        %253 = vmatpush1.msra.mxu0 0.0
        %254 = vmatprep.subr.mxu0 0.0
        %255 = vmatpush1.msra.mxu0 0.0
        %256 = vmatprep.subr.mxu0 0.0
        %257 = vmatpush1.msra.mxu0 0.0
        %258 = vmatprep.subr.mxu0 0.0
        %259 = vmatpush1.msra.mxu0 0.0
        %260 = vmatprep.subr.mxu0 0.0
        %261 = vmatpush1.msra.mxu0 0.0
        %262 = vmatprep.subr.mxu0 0.0
        %263 = vmatpush1.msra.mxu0 0.0
        %264 = vmatprep.subr.mxu0 0.0
        %265 = vmatpush1.msra.mxu0 0.0
        %266 = vmatprep.subr.mxu0 0.0
        %267 = vmatpush1.msra.mxu0 0.0
        %268 = vmatprep.subr.mxu0 0.0
        %269 = vmatpush1.msra.mxu0 0.0
        %270 = vmatprep.subr.mxu0 0.0
        %271 = vmatpush1.msra.mxu0 0.0
        %272 = vmatprep.subr.mxu0 0.0
        %273 = vmatpush1.msra.mxu0 0.0
        %274 = vmatprep.subr.mxu0 0.0
        %275 = vmatpush1.msra.mxu0 0.0
        %276 = vmatprep.subr.mxu0 0.0
        %277 = vmatpush1.msra.mxu0 0.0
        %278 = vmatprep.mubr.f32.mxu0 0.0
        %279 = vmatmul.mubr.f32.gmra.mrb[0].mxu0 %v209
        %v280 = vpop.f32.mrb[0].mxu0
        %v281 = vadd.f32 0.0, %v280
        %v282 = vpop.f32.mrb[0].mxu0
        %283 = vdwg.mxu0
        %v284 = vmax.f32 %v281, 0.0
        %v285 = vld [vmem:[%s2] sm:$0xf]
        %vm286 = vcmask 15360
        %v288 = vsel %vm286, %v285, 0
        %vm290 = vcmask 1041408
        %v292 = vsel %vm290, %v284, 0
        %294 = vmatprep.subr.mxu0 0.0
        %295 = vmatpush1.msra.mxu0 %v292
        %296 = vmatprep.subr.mxu0 0.0
        %297 = vmatpush1.msra.mxu0 0.0
        %298 = vmatprep.subr.mxu0 0.0
        %299 = vmatpush1.msra.mxu0 0.0
        %300 = vmatprep.subr.mxu0 0.0
        %301 = vmatpush1.msra.mxu0 0.0
        %302 = vmatprep.subr.mxu0 0.0
        %303 = vmatpush1.msra.mxu0 0.0
        %304 = vmatprep.subr.mxu0 0.0
        %305 = vmatpush1.msra.mxu0 0.0
        %306 = vmatprep.subr.mxu0 0.0
        %307 = vmatpush1.msra.mxu0 0.0
        %308 = vmatprep.subr.mxu0 0.0
        %309 = vmatpush1.msra.mxu0 0.0
        %310 = vmatprep.subr.mxu0 0.0
        %311 = vmatpush1.msra.mxu0 0.0
        %312 = vmatprep.subr.mxu0 0.0
        %313 = vmatpush1.msra.mxu0 0.0
        %314 = vmatprep.subr.mxu0 0.0
        %315 = vmatpush1.msra.mxu0 0.0
        %316 = vmatprep.subr.mxu0 0.0
        %317 = vmatpush1.msra.mxu0 0.0
        %318 = vmatprep.subr.mxu0 0.0
        %319 = vmatpush1.msra.mxu0 0.0
        %320 = vmatprep.subr.mxu0 0.0
        %321 = vmatpush1.msra.mxu0 0.0
        %322 = vmatprep.subr.mxu0 0.0
        %323 = vmatpush1.msra.mxu0 0.0
        %324 = vmatprep.subr.mxu0 0.0
        %325 = vmatpush1.msra.mxu0 0.0
        %326 = vmatprep.subr.mxu0 0.0
        %327 = vmatpush1.msra.mxu0 0.0
        %328 = vmatprep.subr.mxu0 0.0
        %329 = vmatpush1.msra.mxu0 0.0
        %330 = vmatprep.subr.mxu0 0.0
        %331 = vmatpush1.msra.mxu0 0.0
        %332 = vmatprep.subr.mxu0 0.0
        %333 = vmatpush1.msra.mxu0 0.0
        %334 = vmatprep.subr.mxu0 0.0
        %335 = vmatpush1.msra.mxu0 0.0
        %336 = vmatprep.subr.mxu0 0.0
        %337 = vmatpush1.msra.mxu0 0.0
        %338 = vmatprep.subr.mxu0 0.0
        %339 = vmatpush1.msra.mxu0 0.0
        %340 = vmatprep.subr.mxu0 0.0
        %341 = vmatpush1.msra.mxu0 0.0
        %342 = vmatprep.subr.mxu0 0.0
        %343 = vmatpush1.msra.mxu0 0.0
        %344 = vmatprep.subr.mxu0 0.0
        %345 = vmatpush1.msra.mxu0 0.0
        %346 = vmatprep.subr.mxu0 0.0
        %347 = vmatpush1.msra.mxu0 0.0
        %348 = vmatprep.subr.mxu0 0.0
        %349 = vmatpush1.msra.mxu0 0.0
        %350 = vmatprep.subr.mxu0 0.0
        %351 = vmatpush1.msra.mxu0 0.0
        %352 = vmatprep.subr.mxu0 0.0
        %353 = vmatpush1.msra.mxu0 0.0
        %354 = vmatprep.subr.mxu0 0.0
        %355 = vmatpush1.msra.mxu0 0.0
        %356 = vmatprep.subr.mxu0 0.0
        %357 = vmatpush1.msra.mxu0 0.0
        %358 = vmatprep.mubr.f32.mxu0 0.0
        %359 = vmatmul.mubr.f32.gmra.mrb[0].mxu0 %v288
        %v360 = vpop.f32.mrb[0].mxu0
        %v361 = vadd.f32 0.0, %v360
        %v362 = vpop.f32.mrb[0].mxu0
        %363 = vdwg.mxu0
        %365 = vrot.lane.b32.xlu0 %v361, 127
        %v366 = vpop.permute.xlu0 %365
        %v368 = vadd.f32 %v361, %v366
        %v369 = vxor.u32 %v368, 2147483648
        %v370 = vmul.f32 %v369, 1.442695
        %v371 = vpow.pop %v370
        %v372 = vadd.f32 %v371, 1.0
        %v373 = vrcp.pop %v372
        %v374 = vmul.f32 1.0, %v373
        %376 = vset.pattern.permute.xlu0 0
        %377 = vperm.xlu0 %376, %v374
        %v378 = vpop.permute.xlu0 %377
        %v380 = vunpack.c.l.s4 839922192
        %v381 = vunpack.c.0.s8 %v380
        %v382 = vlaneseq
        %v383 = vshrl.u32 %v382, 7
        %v384 = vsub.s32 %v381, %v383
        %v385 = vrot.slane %v378, %v384
        %v387 = vmul.f32 %v187, %v385
        %388 = vst [vmem:[%s186] sm:$0xff] %v387
        %s389 = sand.u32 %s96, 1
        %s390 = scalar_lea.sflag [#allocation4], %s389
        %s391 = sand.u32 %s96, 1
        %s392 = smul.addr %s391, 8
        %s393 = scalar_lea.vmem [#allocation5], %s392
        // Predicated region
        $region37: #{tpu_custom_call.1} parent=31 // pred_check
          %p394 = pneg %p106
        $region38: #{tpu_custom_call.1} parent=31 // pred_check_branch
          %396 = sbr.rel (%p394) target = $region40
        $region39: #{tpu_custom_call.1} parent=31 // pred_region
          %s398 = ssub.s32 128, 128
          %399 = vsyncadd %s390, %s398
          %s400 = smul.addr %s20, 2
          %s401 = smul.addr %s400, 64
          %s402 = scalar_lea.hbm %s3, %s401
          %s404 = sshll.u32 %s393, 4
          %s405 = int_to_ptr.vmem [resolvable:$true] %s404
          %407 = dma.vmem_to_hbm [thread:$0]  %s405, 128, %s402, %s390
        $region40: #{tpu_custom_call.1} parent=31 // pred_fallthru
          _
      $region32: #{tpu_custom_call.1} parent=5 // pred_fallthru
        _
      %p408 = scmp.le.s32.totalorder 2, %s15
      // Predicated region
      $region41: #{tpu_custom_call.1} parent=5 // pred_check
        %p409 = pneg %p408
      $region42: #{tpu_custom_call.1} parent=5 // pred_check_branch
        %411 = sbr.rel (%p409) target = $region44
      $region43: #{tpu_custom_call.1} parent=5 // pred_region
        %s412 = ssub.s32 %s15, 2
        // Predicated region
        $region45: #{tpu_custom_call.1} parent=43 // pred_check
          %p413 = pneg %p112
        $region46: #{tpu_custom_call.1} parent=43 // pred_check_branch
          %415 = sbr.rel (%p413) target = $region48
        $region47: #{tpu_custom_call.1} parent=43 // pred_region
          %s416 = sand.u32 %s97, 1
          %s417 = scalar_lea.sflag [#allocation4], %s416
          %s418 = sand.u32 %s97, 1
          %s419 = smul.addr %s418, 8
          %s420 = scalar_lea.vmem [#allocation5], %s419
          %421 = dma.done %s417, 128
        $region48: #{tpu_custom_call.1} parent=43 // pred_fallthru
          _
      $region44: #{tpu_custom_call.1} parent=5 // pred_fallthru
        _
    $region6: #{tpu_custom_call.1} parent=1 // loop_footer
      %s19 = sadd.s32 1, %s15
    $region7: #{tpu_custom_call.1} parent=1 // loop_footer_branch
      %14 = sbr.rel target = $region3
    $region8: #{tpu_custom_call.1} parent=1 // loop_exit
      _
    %422 = vsyncpa [#allocation3], 1
    %s423 = scalar_lea.sflag [#allocation3], 1
    %424 = vsyncpa %s423, 1
    %425 = vsyncpa [#allocation4], 1
    %s426 = scalar_lea.sflag [#allocation4], 1
    %427 = vsyncpa %s426, 1

</llo_original>
